<compile_context>
chip_gen: v7x
topology: tpu7x:2x2x1
jax: 0.10.0
libtpu: 0.0.40
codegen_flags: <defaults>
</compile_context>

<pallas_src>
import jax
import jax.numpy as jnp
from jax.experimental import pallas as pl
from jax.experimental.pallas import tpu as pltpu

_LANES = 128
_SUBLANES = 8
_NUM_OUTS = 7
# Problems at/under this many elements take the single-block (un-gridded) path.
_SMALL_MAX_ELEMS = 16 * 1024  # 64 KiB of f32


def _elementwise_kernel(x_ref, y_ref,
                        add_ref, sub_ref, mul_ref, div_ref,
                        eq_ref, gt_ref, lt_ref):
    # Cast on the VPU (free under the DMA); no-op for f32 inputs.
    x = x_ref[...].astype(jnp.float32)
    y = y_ref[...].astype(jnp.float32)
    add_ref[...] = (x + y).astype(add_ref.dtype)
    sub_ref[...] = (x - y).astype(sub_ref.dtype)
    mul_ref[...] = (x * y).astype(mul_ref.dtype)
    # Matches the PyTorch module exactly: x / (y + 1e-6), NOT plain x / y.
    div_ref[...] = (x / (y + 1e-06)).astype(div_ref.dtype)
    eq_ref[...] = (x == y).astype(eq_ref.dtype)
    gt_ref[...] = (x > y).astype(gt_ref.dtype)
    lt_ref[...] = (x < y).astype(lt_ref.dtype)


def pt_module_forward(x, y, *, tile_rows=2048):
    """Pallas implementation of PtModule.forward.

    Returns (addition, subtraction, multiplication, division,
             equality, greater_than, less_than), each with x's shape.
    Arithmetic outputs use the promoted input dtype; comparisons are float32.
    """
    assert x.shape == y.shape, "x and y must share a shape"
    assert tile_rows % _SUBLANES == 0, "tile_rows must be a multiple of 8"

    orig_shape = x.shape
    n = int(x.size)

    arith_dtype = jnp.promote_types(x.dtype, y.dtype)
    if not jnp.issubdtype(arith_dtype, jnp.floating):
        arith_dtype = jnp.float32
    cmp_dtype = jnp.float32

    # Flatten to a lane-dense (rows, 128) slab, padding only to (8,128)
    # granularity -- at most 1023 extra elements, never a full tile.
    chunk = _SUBLANES * _LANES
    n_pad = ((n + chunk - 1) // chunk) * chunk
    rows = n_pad // _LANES

    def to_slab(a):
        a_flat = a.reshape(-1)          # native dtype; cast happens in-kernel
        if n_pad != n:
            a_flat = jnp.pad(a_flat, (0, n_pad - n))
        return a_flat.reshape(rows, _LANES)

    x2 = to_slab(x)
    y2 = to_slab(y)

    out_dtypes = (arith_dtype,) * 4 + (cmp_dtype,) * 3
    out_shape = tuple(
        jax.ShapeDtypeStruct((rows, _LANES), dt) for dt in out_dtypes)

    bytes_per_elem = (x2.dtype.itemsize + y2.dtype.itemsize
                      + sum(jnp.dtype(dt).itemsize for dt in out_dtypes))
    cost = pl.CostEstimate(flops=10 * n, transcendentals=0,
                           bytes_accessed=bytes_per_elem * n)

    if n <= _SMALL_MAX_ELEMS:
        # Tiny problem: one un-gridded invocation, everything resident in VMEM.
        vmem_spec = pl.BlockSpec(memory_space=pltpu.MemorySpace.VMEM)
        outs = pl.pallas_call(
            _elementwise_kernel,
            in_specs=[vmem_spec, vmem_spec],
            out_specs=tuple(vmem_spec for _ in range(_NUM_OUTS)),
            out_shape=out_shape,
            cost_estimate=cost,
        )(x2, y2)
    else:
        # Gridded, double-buffered streaming path.  Shrink the tile if needed
        # so the grid has >= 2 steps ("parallel" axis can shard across the two
        # v7x TensorCores; harmless on single-TC v5e/v6e).
        half_rows = ((-(-rows // 2) + _SUBLANES - 1) // _SUBLANES) * _SUBLANES
        grid_tile = max(_SUBLANES, min(tile_rows, half_rows))
        grid = (pl.cdiv(rows, grid_tile),)

        io_spec = pl.BlockSpec((grid_tile, _LANES), lambda i: (i, 0))

        # Double-buffered VMEM footprint: (2 inputs + 7 outputs) x 2 buffers.
        tile_bytes = grid_tile * _LANES * 4
        needed = (2 + _NUM_OUTS) * 2 * tile_bytes
        vmem_limit = min(max(needed + (4 << 20), 16 << 20), 48 << 20)

        outs = pl.pallas_call(
            _elementwise_kernel,
            grid=grid,
            in_specs=[io_spec, io_spec],
            out_specs=tuple(io_spec for _ in range(_NUM_OUTS)),
            out_shape=out_shape,
            cost_estimate=cost,
            compiler_params=pltpu.CompilerParams(
                dimension_semantics=("parallel",),
                vmem_limit_bytes=vmem_limit,
            ),
        )(x2, y2)

    def from_slab(a):
        if n_pad != n:
            a = a.reshape(-1)[:n]
        return a.reshape(orig_shape)

    return tuple(from_slab(o) for o in outs)


def _reference(x, y):
    return (
        x + y,
        x - y,
        x * y,
        x / (y + 1e-06),
        (x == y).astype(jnp.float32),
        (x > y).astype(jnp.float32),
        (x < y).astype(jnp.float32),
    )


def _check(outs, refs, tag):
    for k, (got, ref) in enumerate(zip(outs, refs)):
        assert got.shape == ref.shape, f"{tag}[{k}] shape mismatch"
        assert got.dtype == ref.dtype, f"{tag}[{k}] dtype mismatch"
        assert jnp.allclose(got, ref, rtol=1e-6, atol=1e-6), f"{tag}[{k}] value mismatch"


if __name__ == "__main__":
    key = jax.random.PRNGKey(0)
    kx, ky = jax.random.split(key)

    # --- shipped problem size: small path (single un-gridded VMEM block) ---
    x = jax.random.normal(kx, (2, 4, 16, 16), dtype=jnp.float32)
    y = jax.random.normal(ky, (2, 4, 16, 16), dtype=jnp.float32)
    # Make some elements exactly equal so `equality` is nontrivial.
    y = y.at[0, 0, :4, :4].set(x[0, 0, :4, :4])
    outs = jax.block_until_ready(pt_module_forward(x, y))
    _check(outs, _reference(x, y), "small")

    # --- gridded path: multiple of the tile (evenly divided grid) ---
    kx2, ky2 = jax.random.split(jax.random.PRNGKey(1))
    xb = jax.random.normal(kx2, (2, 4, 64, 64), dtype=jnp.float32)
    yb = jax.random.normal(ky2, (2, 4, 64, 64), dtype=jnp.float32)
    yb = yb.at[1, 2, :8, :8].set(xb[1, 2, :8, :8])
    outs_b = jax.block_until_ready(pt_module_forward(xb, yb, tile_rows=8))
    _check(outs_b, _reference(xb, yb), "grid-even")

    # --- gridded path: ragged last block + tail padding ---
    kx3, ky3 = jax.random.split(jax.random.PRNGKey(2))
    xc = jax.random.normal(kx3, (100, 200), dtype=jnp.float32)
    yc = jax.random.normal(ky3, (100, 200), dtype=jnp.float32)
    yc = yc.at[10:20, 5:15].set(xc[10:20, 5:15])
    outs_c = jax.block_until_ready(pt_module_forward(xc, yc, tile_rows=64))
    _check(outs_c, _reference(xc, yc), "grid-ragged")

    print("KERNEL_OK")
</pallas_src>

<mosaic_0001>
module attributes {stable_mosaic.version = 11 : i64} {
  func.func @_elementwise_kernel(%arg0: memref<16x128xf32, #tpu.memory_space<vmem>>, %arg1: memref<16x128xf32, #tpu.memory_space<vmem>>, %arg2: memref<16x128xf32, #tpu.memory_space<vmem>>, %arg3: memref<16x128xf32, #tpu.memory_space<vmem>>, %arg4: memref<16x128xf32, #tpu.memory_space<vmem>>, %arg5: memref<16x128xf32, #tpu.memory_space<vmem>>, %arg6: memref<16x128xf32, #tpu.memory_space<vmem>>, %arg7: memref<16x128xf32, #tpu.memory_space<vmem>>, %arg8: memref<16x128xf32, #tpu.memory_space<vmem>>) attributes {dimension_semantics = [], scalar_prefetch = 0 : i64, scratch_operands = 0 : i64, tpu.core_type = #tpu.core_type<tc>} {
    %c0 = arith.constant 0 : index
    %c0_0 = arith.constant 0 : index
    %0 = vector.load %arg0[%c0, %c0_0] : memref<16x128xf32, #tpu.memory_space<vmem>>, vector<16x128xf32>
    %c0_1 = arith.constant 0 : index
    %c0_2 = arith.constant 0 : index
    %1 = vector.load %arg1[%c0_1, %c0_2] : memref<16x128xf32, #tpu.memory_space<vmem>>, vector<16x128xf32>
    %2 = arith.addf %0, %1 : vector<16x128xf32>
    %c0_3 = arith.constant 0 : index
    %c0_4 = arith.constant 0 : index
    %3 = vector.load %arg2[%c0_3, %c0_4] : memref<16x128xf32, #tpu.memory_space<vmem>>, vector<16x128xf32>
    tpu.vector_store %arg2[%c0_3, %c0_4], %2 {strides = array<i32>} : memref<16x128xf32, #tpu.memory_space<vmem>>, vector<16x128xf32>,
    %4 = arith.subf %0, %1 : vector<16x128xf32>
    %c0_5 = arith.constant 0 : index
    %c0_6 = arith.constant 0 : index
    %5 = vector.load %arg3[%c0_5, %c0_6] : memref<16x128xf32, #tpu.memory_space<vmem>>, vector<16x128xf32>
    tpu.vector_store %arg3[%c0_5, %c0_6], %4 {strides = array<i32>} : memref<16x128xf32, #tpu.memory_space<vmem>>, vector<16x128xf32>,
    %6 = arith.mulf %0, %1 : vector<16x128xf32>
    %c0_7 = arith.constant 0 : index
    %c0_8 = arith.constant 0 : index
    %7 = vector.load %arg4[%c0_7, %c0_8] : memref<16x128xf32, #tpu.memory_space<vmem>>, vector<16x128xf32>
    tpu.vector_store %arg4[%c0_7, %c0_8], %6 {strides = array<i32>} : memref<16x128xf32, #tpu.memory_space<vmem>>, vector<16x128xf32>,
    %cst = arith.constant 9.99999997E-7 : f32
    %8 = vector.broadcast %cst : f32 to vector<16x128xf32>
    %9 = arith.addf %1, %8 : vector<16x128xf32>
    %10 = arith.divf %0, %9 : vector<16x128xf32>
    %c0_9 = arith.constant 0 : index
    %c0_10 = arith.constant 0 : index
    %11 = vector.load %arg5[%c0_9, %c0_10] : memref<16x128xf32, #tpu.memory_space<vmem>>, vector<16x128xf32>
    tpu.vector_store %arg5[%c0_9, %c0_10], %10 {strides = array<i32>} : memref<16x128xf32, #tpu.memory_space<vmem>>, vector<16x128xf32>,
    %12 = arith.cmpf oeq, %0, %1 : vector<16x128xf32>
    %13 = arith.extui %12 : vector<16x128xi1> to vector<16x128xi32>
    %14 = arith.sitofp %13 : vector<16x128xi32> to vector<16x128xf32>
    %c0_11 = arith.constant 0 : index
    %c0_12 = arith.constant 0 : index
    %15 = vector.load %arg6[%c0_11, %c0_12] : memref<16x128xf32, #tpu.memory_space<vmem>>, vector<16x128xf32>
    tpu.vector_store %arg6[%c0_11, %c0_12], %14 {strides = array<i32>} : memref<16x128xf32, #tpu.memory_space<vmem>>, vector<16x128xf32>,
    %16 = arith.cmpf ogt, %0, %1 : vector<16x128xf32>
    %17 = arith.extui %16 : vector<16x128xi1> to vector<16x128xi32>
    %18 = arith.sitofp %17 : vector<16x128xi32> to vector<16x128xf32>
    %c0_13 = arith.constant 0 : index
    %c0_14 = arith.constant 0 : index
    %19 = vector.load %arg7[%c0_13, %c0_14] : memref<16x128xf32, #tpu.memory_space<vmem>>, vector<16x128xf32>
    tpu.vector_store %arg7[%c0_13, %c0_14], %18 {strides = array<i32>} : memref<16x128xf32, #tpu.memory_space<vmem>>, vector<16x128xf32>,
    %20 = arith.cmpf olt, %0, %1 : vector<16x128xf32>
    %21 = arith.extui %20 : vector<16x128xi1> to vector<16x128xi32>
    %22 = arith.sitofp %21 : vector<16x128xi32> to vector<16x128xf32>
    %c0_15 = arith.constant 0 : index
    %c0_16 = arith.constant 0 : index
    %23 = vector.load %arg8[%c0_15, %c0_16] : memref<16x128xf32, #tpu.memory_space<vmem>>, vector<16x128xf32>
    tpu.vector_store %arg8[%c0_15, %c0_16], %22 {strides = array<i32>} : memref<16x128xf32, #tpu.memory_space<vmem>>, vector<16x128xf32>,
    return
  }
}

</mosaic_0001>

<llo_original>
// kernel: tpu_custom_call.1
$region0: #{tpu_custom_call.1}
  #allocation0 [shape = 'u32[]', space=smem, size = 0x4, offset = 0x4, fixed_abs, tag = 'smem constant byte address 0x4 - core index']
  #allocation1 [shape = 'u32[144,128]{1,0:T(1,128)}', space=vmem, size = 0x12000, scoped, tag = 'internal scratch']
  %s0 = inlined_call_operand.hbm [shape: f32[16,128], index: 0, kind: input, shape index: {}]
  %s1 = inlined_call_operand.hbm [shape: f32[16,128], index: 1, kind: input, shape index: {}]
  %s2 = inlined_call_operand.hbm [shape: f32[16,128], index: 2, kind: output, shape index: {0}]
  %s3 = inlined_call_operand.hbm [shape: f32[16,128], index: 3, kind: output, shape index: {1}]
  %s4 = inlined_call_operand.hbm [shape: f32[16,128], index: 4, kind: output, shape index: {2}]
  %s5 = inlined_call_operand.hbm [shape: f32[16,128], index: 5, kind: output, shape index: {3}]
  %s6 = inlined_call_operand.hbm [shape: f32[16,128], index: 6, kind: output, shape index: {4}]
  %s7 = inlined_call_operand.hbm [shape: f32[16,128], index: 7, kind: output, shape index: {5}]
  %s8 = inlined_call_operand.hbm [shape: f32[16,128], index: 8, kind: output, shape index: {6}]
  %9 = xla_tuple %s2, %s3, %s4, %s5, %s6, %s7, %s8
  %s10 = sld [smem:[#allocation0]]
  $region74: #{tpu_custom_call.1} parent=0
    _
  %s12 = ssub.s32 1, %s10
  %s13 = scalar_select 0, %s12, %s10
  $region1: #{tpu_custom_call.1} parent=0
    #allocation2 [shape = 'u8[8192]{0}', space=vmem, size = 0x2000, scoped, tag = 'input window, operand 0, single buffered']
    #allocation3 [shape = 's32[1]{0}', space=sflag, size = 0x4, scoped, tag = 'scoped memory for tpu_custom_call.1']
    #allocation4 [shape = 's32[1]{0}', space=sflag, size = 0x4, scoped, tag = 'scoped memory for tpu_custom_call.1']
    #allocation5 [shape = 'u8[8192]{0}', space=vmem, size = 0x2000, scoped, tag = 'input window, operand 1, single buffered']
    #allocation6 [shape = 's32[1]{0}', space=sflag, size = 0x4, scoped, tag = 'scoped memory for tpu_custom_call.1']
    #allocation7 [shape = 'u8[8192]{0}', space=vmem, size = 0x2000, scoped, tag = 'output window, operand 0, single buffered']
    #allocation8 [shape = 'u8[8192]{0}', space=vmem, size = 0x2000, scoped, tag = 'output window, operand 1, single buffered']
    #allocation9 [shape = 's32[1]{0}', space=sflag, size = 0x4, scoped, tag = 'scoped memory for tpu_custom_call.1']
    #allocation10 [shape = 'u8[8192]{0}', space=vmem, size = 0x2000, scoped, tag = 'output window, operand 2, single buffered']
    #allocation11 [shape = 'u8[8192]{0}', space=vmem, size = 0x2000, scoped, tag = 'output window, operand 3, single buffered']
    #allocation12 [shape = 's32[1]{0}', space=sflag, size = 0x4, scoped, tag = 'scoped memory for tpu_custom_call.1']
    #allocation13 [shape = 'u8[8192]{0}', space=vmem, size = 0x2000, scoped, tag = 'output window, operand 4, single buffered']
    #allocation14 [shape = 'u8[8192]{0}', space=vmem, size = 0x2000, scoped, tag = 'output window, operand 5, single buffered']
    #allocation15 [shape = 's32[1]{0}', space=sflag, size = 0x4, scoped, tag = 'scoped memory for tpu_custom_call.1']
    #allocation16 [shape = 'u8[8192]{0}', space=vmem, size = 0x2000, scoped, tag = 'output window, operand 6, single buffered']
    %14 = vsyncpa [#allocation3], 0
    %15 = vsyncpa [#allocation6], 0
    %16 = vsyncpa [#allocation4], 0
    %17 = vsyncpa [#allocation9], 0
    %18 = vsyncpa [#allocation12], 0
    %19 = vsyncpa [#allocation15], 0
    // Predicated region
    $region2: #{tpu_custom_call.1} parent=1 // pred_check
      _
    $region3: #{tpu_custom_call.1} parent=1 // pred_check_branch
      %21 = sbr.rel (0) target = $region5
    $region4: #{tpu_custom_call.1} parent=1 // pred_region
      %s23 = ssub.s32 256, 256
      %24 = vsyncadd [#allocation3], %s23
      %s25 = sshll.u32 [#allocation2], 4
      %s26 = int_to_ptr.vmem [resolvable:$true] %s25
      %31 = dma.hbm_to_vmem [thread:$0]  %s0, 256, %s26, [#allocation3], 128, 128, 8
    $region5: #{tpu_custom_call.1} parent=1 // pred_fallthru
      _
    // Predicated region
    $region6: #{tpu_custom_call.1} parent=1 // pred_check
      _
    $region7: #{tpu_custom_call.1} parent=1 // pred_check_branch
      %33 = sbr.rel (0) target = $region9
    $region8: #{tpu_custom_call.1} parent=1 // pred_region
      %s35 = ssub.s32 256, 256
      %36 = vsyncadd [#allocation6], %s35
      %s37 = sshll.u32 [#allocation5], 4
      %s38 = int_to_ptr.vmem [resolvable:$true] %s37
      %43 = dma.hbm_to_vmem [thread:$0]  %s1, 256, %s38, [#allocation6], 128, 128, 8
    $region9: #{tpu_custom_call.1} parent=1 // pred_fallthru
      _
    // Predicated region
    $region10: #{tpu_custom_call.1} parent=1 // pred_check
      _
    $region11: #{tpu_custom_call.1} parent=1 // pred_check_branch
      %45 = sbr.rel (0) target = $region13
    $region12: #{tpu_custom_call.1} parent=1 // pred_region
      %46 = dma.done [#allocation3], 256
    $region13: #{tpu_custom_call.1} parent=1 // pred_fallthru
      _
    // Predicated region
    $region14: #{tpu_custom_call.1} parent=1 // pred_check
      _
    $region15: #{tpu_custom_call.1} parent=1 // pred_check_branch
      %48 = sbr.rel (0) target = $region17
    $region16: #{tpu_custom_call.1} parent=1 // pred_region
      %49 = dma.done [#allocation6], 256
    $region17: #{tpu_custom_call.1} parent=1 // pred_fallthru
      _
    %v50 = vld [vmem:[#allocation2] sm:$0xff]
    %v51 = vld [vmem:[#allocation2 + $0x8] sm:$0xff]
    %v52 = vld [vmem:[#allocation5] sm:$0xff]
    %v53 = vld [vmem:[#allocation5 + $0x8] sm:$0xff]
    %v54 = vadd.f32 %v50, %v52
    %v55 = vadd.f32 %v51, %v53
    %56 = vst [vmem:[#allocation7] sm:$0xff] %v54
    %57 = vst [vmem:[#allocation7 + $0x8] sm:$0xff] %v55
    %v58 = vsub.f32 %v50, %v52
    %v59 = vsub.f32 %v51, %v53
    %60 = vst [vmem:[#allocation8] sm:$0xff] %v58
    %61 = vst [vmem:[#allocation8 + $0x8] sm:$0xff] %v59
    %v62 = vmul.f32 %v50, %v52
    %v63 = vmul.f32 %v51, %v53
    %64 = vst [vmem:[#allocation10] sm:$0xff] %v62
    %65 = vst [vmem:[#allocation10 + $0x8] sm:$0xff] %v63
    %v66 = vadd.f32 %v52, 1e-06
    %v67 = vadd.f32 %v53, 1e-06
    %v68 = vrcp.pop %v66
    %v69 = vmul.f32 %v50, %v68
    %v70 = vrcp.pop %v67
    %v71 = vmul.f32 %v51, %v70
    %72 = vst [vmem:[#allocation11] sm:$0xff] %v69
    %73 = vst [vmem:[#allocation11 + $0x8] sm:$0xff] %v71
    %vm74 = vcmp.eq.f32.partialorder %v50, %v52
    %vm75 = vcmp.eq.f32.partialorder %v51, %v53
    %v76 = vsel %vm74, 1, 0
    %v77 = vsel %vm75, 1, 0
    %v78 = vcvt.s32.f32 %v76
    %v79 = vcvt.s32.f32 %v77
    %80 = vst [vmem:[#allocation13] sm:$0xff] %v78
    %81 = vst [vmem:[#allocation13 + $0x8] sm:$0xff] %v79
    %vm82 = vcmp.gt.f32.partialorder %v50, %v52
    %vm83 = vcmp.gt.f32.partialorder %v51, %v53
    %v84 = vsel %vm82, 1, 0
    %v85 = vsel %vm83, 1, 0
    %v86 = vcvt.s32.f32 %v84
    %v87 = vcvt.s32.f32 %v85
    %88 = vst [vmem:[#allocation14] sm:$0xff] %v86
    %89 = vst [vmem:[#allocation14 + $0x8] sm:$0xff] %v87
    %vm90 = vcmp.lt.f32.partialorder %v50, %v52
    %vm91 = vcmp.lt.f32.partialorder %v51, %v53
    %v92 = vsel %vm90, 1, 0
    %v93 = vsel %vm91, 1, 0
    %v94 = vcvt.s32.f32 %v92
    %v95 = vcvt.s32.f32 %v93
    %96 = vst [vmem:[#allocation16] sm:$0xff] %v94
    %97 = vst [vmem:[#allocation16 + $0x8] sm:$0xff] %v95
    // Predicated region
    $region18: #{tpu_custom_call.1} parent=1 // pred_check
      _
    $region19: #{tpu_custom_call.1} parent=1 // pred_check_branch
      %99 = sbr.rel (0) target = $region21
    $region20: #{tpu_custom_call.1} parent=1 // pred_region
      %s101 = ssub.s32 256, 256
      %102 = vsyncadd [#allocation4], %s101
      %s103 = sshll.u32 [#allocation7], 4
      %s104 = int_to_ptr.vmem [resolvable:$true] %s103
      %109 = dma.vmem_to_hbm [thread:$0]  %s104, 256, %s2, [#allocation4], 128, 128, 8
    $region21: #{tpu_custom_call.1} parent=1 // pred_fallthru
      _
    // Predicated region
    $region22: #{tpu_custom_call.1} parent=1 // pred_check
      _
    $region23: #{tpu_custom_call.1} parent=1 // pred_check_branch
      %111 = sbr.rel (0) target = $region25
    $region24: #{tpu_custom_call.1} parent=1 // pred_region
      %s113 = ssub.s32 256, 256
      %114 = vsyncadd [#allocation9], %s113
      %s115 = sshll.u32 [#allocation8], 4
      %s116 = int_to_ptr.vmem [resolvable:$true] %s115
      %121 = dma.vmem_to_hbm [thread:$0]  %s116, 256, %s3, [#allocation9], 128, 128, 8
    $region25: #{tpu_custom_call.1} parent=1 // pred_fallthru
      _
    // Predicated region
    $region26: #{tpu_custom_call.1} parent=1 // pred_check
      _
    $region27: #{tpu_custom_call.1} parent=1 // pred_check_branch
      %123 = sbr.rel (0) target = $region29
    $region28: #{tpu_custom_call.1} parent=1 // pred_region
      %s125 = ssub.s32 256, 256
      %126 = vsyncadd [#allocation9], %s125
      %s127 = sshll.u32 [#allocation10], 4
      %s128 = int_to_ptr.vmem [resolvable:$true] %s127
      %133 = dma.vmem_to_hbm [thread:$0]  %s128, 256, %s4, [#allocation9], 128, 128, 8
    $region29: #{tpu_custom_call.1} parent=1 // pred_fallthru
      _
    // Predicated region
    $region30: #{tpu_custom_call.1} parent=1 // pred_check
      _
    $region31: #{tpu_custom_call.1} parent=1 // pred_check_branch
      %135 = sbr.rel (0) target = $region33
    $region32: #{tpu_custom_call.1} parent=1 // pred_region
      %s137 = ssub.s32 256, 256
      %138 = vsyncadd [#allocation12], %s137
      %s139 = sshll.u32 [#allocation11], 4
      %s140 = int_to_ptr.vmem [resolvable:$true] %s139
      %145 = dma.vmem_to_hbm [thread:$0]  %s140, 256, %s5, [#allocation12], 128, 128, 8
    $region33: #{tpu_custom_call.1} parent=1 // pred_fallthru
      _
    // Predicated region
    $region34: #{tpu_custom_call.1} parent=1 // pred_check
      _
    $region35: #{tpu_custom_call.1} parent=1 // pred_check_branch
      %147 = sbr.rel (0) target = $region37
    $region36: #{tpu_custom_call.1} parent=1 // pred_region
      %s149 = ssub.s32 256, 256
      %150 = vsyncadd [#allocation12], %s149
      %s151 = sshll.u32 [#allocation13], 4
      %s152 = int_to_ptr.vmem [resolvable:$true] %s151
      %157 = dma.vmem_to_hbm [thread:$0]  %s152, 256, %s6, [#allocation12], 128, 128, 8
    $region37: #{tpu_custom_call.1} parent=1 // pred_fallthru
      _
    // Predicated region
    $region38: #{tpu_custom_call.1} parent=1 // pred_check
      _
    $region39: #{tpu_custom_call.1} parent=1 // pred_check_branch
      %159 = sbr.rel (0) target = $region41
    $region40: #{tpu_custom_call.1} parent=1 // pred_region
      %s161 = ssub.s32 256, 256
      %162 = vsyncadd [#allocation15], %s161
      %s163 = sshll.u32 [#allocation14], 4
      %s164 = int_to_ptr.vmem [resolvable:$true] %s163
      %169 = dma.vmem_to_hbm [thread:$0]  %s164, 256, %s7, [#allocation15], 128, 128, 8
    $region41: #{tpu_custom_call.1} parent=1 // pred_fallthru
      _
    // Predicated region
    $region42: #{tpu_custom_call.1} parent=1 // pred_check
      _
    $region43: #{tpu_custom_call.1} parent=1 // pred_check_branch
      %171 = sbr.rel (0) target = $region45
    $region44: #{tpu_custom_call.1} parent=1 // pred_region
      %s173 = ssub.s32 256, 256
      %174 = vsyncadd [#allocation15], %s173
      %s175 = sshll.u32 [#allocation16], 4
      %s176 = int_to_ptr.vmem [resolvable:$true] %s175
      %181 = dma.vmem_to_hbm [thread:$0]  %s176, 256, %s8, [#allocation15], 128, 128, 8
    $region45: #{tpu_custom_call.1} parent=1 // pred_fallthru
      _
    // Predicated region
    $region46: #{tpu_custom_call.1} parent=1 // pred_check
      _
    $region47: #{tpu_custom_call.1} parent=1 // pred_check_branch
      %183 = sbr.rel (0) target = $region49
    $region48: #{tpu_custom_call.1} parent=1 // pred_region
      %184 = dma.done [#allocation4], 256
    $region49: #{tpu_custom_call.1} parent=1 // pred_fallthru
      _
    // Predicated region
    $region50: #{tpu_custom_call.1} parent=1 // pred_check
      _
    $region51: #{tpu_custom_call.1} parent=1 // pred_check_branch
      %186 = sbr.rel (0) target = $region53
    $region52: #{tpu_custom_call.1} parent=1 // pred_region
      %187 = dma.done [#allocation9], 256
    $region53: #{tpu_custom_call.1} parent=1 // pred_fallthru
      _
    // Predicated region
    $region54: #{tpu_custom_call.1} parent=1 // pred_check
      _
    $region55: #{tpu_custom_call.1} parent=1 // pred_check_branch
      %189 = sbr.rel (0) target = $region57
    $region56: #{tpu_custom_call.1} parent=1 // pred_region
      %190 = dma.done [#allocation9], 256
    $region57: #{tpu_custom_call.1} parent=1 // pred_fallthru
      _
    // Predicated region
    $region58: #{tpu_custom_call.1} parent=1 // pred_check
      _
    $region59: #{tpu_custom_call.1} parent=1 // pred_check_branch
      %192 = sbr.rel (0) target = $region61
    $region60: #{tpu_custom_call.1} parent=1 // pred_region
      %193 = dma.done [#allocation12], 256
    $region61: #{tpu_custom_call.1} parent=1 // pred_fallthru
      _
    // Predicated region
    $region62: #{tpu_custom_call.1} parent=1 // pred_check
      _
    $region63: #{tpu_custom_call.1} parent=1 // pred_check_branch
      %195 = sbr.rel (0) target = $region65
    $region64: #{tpu_custom_call.1} parent=1 // pred_region
      %196 = dma.done [#allocation12], 256
    $region65: #{tpu_custom_call.1} parent=1 // pred_fallthru
      _
    // Predicated region
    $region66: #{tpu_custom_call.1} parent=1 // pred_check
      _
    $region67: #{tpu_custom_call.1} parent=1 // pred_check_branch
      %198 = sbr.rel (0) target = $region69
    $region68: #{tpu_custom_call.1} parent=1 // pred_region
      %199 = dma.done [#allocation15], 256
    $region69: #{tpu_custom_call.1} parent=1 // pred_fallthru
      _
    // Predicated region
    $region70: #{tpu_custom_call.1} parent=1 // pred_check
      _
    $region71: #{tpu_custom_call.1} parent=1 // pred_check_branch
      %201 = sbr.rel (0) target = $region73
    $region72: #{tpu_custom_call.1} parent=1 // pred_region
      %202 = dma.done [#allocation15], 256
    $region73: #{tpu_custom_call.1} parent=1 // pred_fallthru
      _
    %203 = vsyncpa [#allocation3], 1
    %204 = vsyncpa [#allocation6], 1
    %205 = vsyncpa [#allocation4], 1
    %206 = vsyncpa [#allocation9], 1
    %207 = vsyncpa [#allocation12], 1
    %208 = vsyncpa [#allocation15], 1

</llo_original>
